<compile_context>
chip_gen: v7x
topology: tpu7x:2x2x1
jax: 0.10.0
libtpu: 0.0.40
codegen_flags: <defaults>
</compile_context>

<pallas_src>
import functools

import jax
import jax.numpy as jnp
from jax.experimental import pallas as pl
from jax.experimental.pallas import tpu as pltpu

MAX_TM = 1024  # max batch tile (lane axis); multiple of 128, tiny VMEM footprint


def _round_up(n, m):
    return ((n + m - 1) // m) * m


def ffn_kernel(x_ref, w1_ref, b1_ref, w2_ref, b2_ref, w3_ref, b3_ref, o_ref):
    # Layout: batch on lanes, features on sublanes.
    #   x_ref : (2,  TM)   input tile (transposed)
    #   w1_ref: (10, 2)    layer-1 weight, (out, in)
    #   b1_ref: (10, 1)
    #   w2_ref: (5, 10)
    #   b2_ref: (5, 1)
    #   w3_ref: (1, 5)
    #   b3_ref: (1, 1)
    #   o_ref : (1,  TM)   lane-dense output tile
    tm = x_ref.shape[1]

    x0 = x_ref[0:1, :]  # (1, TM)
    x1 = x_ref[1:2, :]  # (1, TM)

    # Layer 1: (2 -> 10) as two VPU broadcast-MACs (no MXU, no dead K padding).
    w1 = w1_ref[...]  # (10, 2)
    h1 = jnp.maximum(w1[:, 0:1] * x0 + w1[:, 1:2] * x1 + b1_ref[...], 0.0)  # (10, TM)

    # Layer 2: (10 -> 5) as 10 broadcast-MACs on the VPU.
    w2 = w2_ref[...]  # (5, 10)
    acc2 = jnp.broadcast_to(b2_ref[...], (5, tm))
    for k in range(10):  # unrolled at trace time
        acc2 = acc2 + w2[:, k:k + 1] * h1[k:k + 1, :]
    h2 = jnp.maximum(acc2, 0.0)  # (5, TM)

    # Layer 3: (5 -> 1) as 5 broadcast-MACs; result is already lane-dense (1, TM).
    w3 = w3_ref[...]  # (1, 5)
    acc3 = jnp.broadcast_to(b3_ref[...], (1, tm))
    for k in range(5):
        acc3 = acc3 + w3[:, k:k + 1] * h2[k:k + 1, :]

    o_ref[...] = acc3.astype(o_ref.dtype)  # single full-width, unmasked store


@functools.partial(jax.jit, static_argnames=("tm",))
def _ffn_pallas(x_t, w1t, b1c, w2t, b2c, w3t, b3c, *, tm):
    n_pad = x_t.shape[1]
    grid = (n_pad // tm,)

    const = lambda i: (0, 0)  # revisited blocks: weights/biases DMA'd once

    return pl.pallas_call(
        ffn_kernel,
        out_shape=jax.ShapeDtypeStruct((1, n_pad), jnp.float32),
        grid_spec=pltpu.PrefetchScalarGridSpec(
            num_scalar_prefetch=0,
            grid=grid,
            in_specs=[
                pl.BlockSpec((2, tm), lambda i: (0, i)),      # x tile (compact, 8 B/sample)
                pl.BlockSpec(w1t.shape, const),
                pl.BlockSpec(b1c.shape, const),
                pl.BlockSpec(w2t.shape, const),
                pl.BlockSpec(b2c.shape, const),
                pl.BlockSpec(w3t.shape, const),
                pl.BlockSpec(b3c.shape, const),
            ],
            out_specs=pl.BlockSpec((1, tm), lambda i: (0, i)),  # lane-dense output tile
        ),
        compiler_params=pltpu.CompilerParams(
            dimension_semantics=("parallel",),  # shards grid across TCs on v7x
        ),
    )(x_t, w1t, b1c, w2t, b2c, w3t, b3c)


def ffn_forward(x, params, tm=None):
    """x: (N, 2) float32 -> (N, 1) float32, matching the PyTorch FFN forward."""
    (w1, b1), (w2, b2), (w3, b3) = params
    N = x.shape[0]

    if tm is None:
        # Big tiles for large N (amortize per-step overhead); minimal padding for tiny N.
        tm = min(MAX_TM, _round_up(max(N, 1), 128))
    n_pad = _round_up(N, tm)

    # Transposed, compact layouts (batch on the lane axis).
    x_t = jnp.zeros((2, n_pad), jnp.float32).at[:, :N].set(x.T)
    w1t = w1.T.astype(jnp.float32)            # (10, 2)
    w2t = w2.T.astype(jnp.float32)            # (5, 10)
    w3t = w3.T.astype(jnp.float32)            # (1, 5)
    b1c = b1.reshape(-1, 1).astype(jnp.float32)  # (10, 1)
    b2c = b2.reshape(-1, 1).astype(jnp.float32)  # (5, 1)
    b3c = b3.reshape(-1, 1).astype(jnp.float32)  # (1, 1)

    out_p = _ffn_pallas(x_t, w1t, b1c, w2t, b2c, w3t, b3c, tm=tm)  # (1, n_pad)
    return out_p[0, :N].reshape(N, 1)


def init_params(key):
    """Deterministic init mimicking nn.Linear default: U(-1/sqrt(fan_in), 1/sqrt(fan_in))."""
    dims = [(2, 10), (10, 5), (5, 1)]
    params = []
    for (fan_in, fan_out) in dims:
        key, kw, kb = jax.random.split(key, 3)
        bound = 1.0 / jnp.sqrt(fan_in)
        w = jax.random.uniform(kw, (fan_in, fan_out), jnp.float32, -bound, bound)
        b = jax.random.uniform(kb, (fan_out,), jnp.float32, -bound, bound)
        params.append((w, b))
    return params


def ffn_reference(x, params):
    (w1, b1), (w2, b2), (w3, b3) = params
    h = jnp.maximum(x @ w1 + b1, 0.0)
    h = jnp.maximum(h @ w2 + b2, 0.0)
    return h @ w3 + b3


if __name__ == "__main__":
    key = jax.random.PRNGKey(0)
    key, kx = jax.random.split(key)
    params = init_params(key)

    # Small primary run: batch=8, in_features=2 (as the module implies).
    x_small = jax.random.normal(kx, (8, 2), jnp.float32)
    out_small = jax.block_until_ready(ffn_forward(x_small, params))
    ref_small = ffn_reference(x_small, params)
    assert out_small.shape == (8, 1), out_small.shape
    assert jnp.allclose(out_small, ref_small, atol=1e-5, rtol=1e-5), "mismatch (small)"

    # Secondary run exercising the multi-step tiled grid path (TM=1024, grid=(3,)).
    key, kx2 = jax.random.split(key)
    x_big = jax.random.normal(kx2, (2500, 2), jnp.float32)
    out_big = jax.block_until_ready(ffn_forward(x_big, params))
    ref_big = ffn_reference(x_big, params)
    assert out_big.shape == (2500, 1), out_big.shape
    assert jnp.allclose(out_big, ref_big, atol=1e-5, rtol=1e-5), "mismatch (big)"

    print("KERNEL_OK")
</pallas_src>

<mosaic_0001>
module attributes {stable_mosaic.version = 11 : i64} {
  func.func @ffn_kernel(%arg0: i32, %arg1: memref<2x128xf32, #tpu.memory_space<vmem>>, %arg2: memref<10x2xf32, #tpu.memory_space<vmem>>, %arg3: memref<10x1xf32, #tpu.memory_space<vmem>>, %arg4: memref<5x10xf32, #tpu.memory_space<vmem>>, %arg5: memref<5x1xf32, #tpu.memory_space<vmem>>, %arg6: memref<1x5xf32, #tpu.memory_space<vmem>>, %arg7: memref<1x1xf32, #tpu.memory_space<vmem>>, %arg8: memref<1x128xf32, #tpu.memory_space<vmem>>) attributes {dimension_semantics = [#tpu.dimension_semantics<parallel>], iteration_bounds = array<i64: 1>, scalar_prefetch = 0 : i64, scratch_operands = 0 : i64, tpu.core_type = #tpu.core_type<tc>, window_params = [{transform_indices = @transform_0, window_bounds = array<i64: 2, 128>}, {pipeline_mode = #tpu.pipeline_mode<synchronous>, transform_indices = @transform_1, window_bounds = array<i64: 10, 2>}, {pipeline_mode = #tpu.pipeline_mode<synchronous>, transform_indices = @transform_2, window_bounds = array<i64: 10, 1>}, {pipeline_mode = #tpu.pipeline_mode<synchronous>, transform_indices = @transform_3, window_bounds = array<i64: 5, 10>}, {pipeline_mode = #tpu.pipeline_mode<synchronous>, transform_indices = @transform_4, window_bounds = array<i64: 5, 1>}, {pipeline_mode = #tpu.pipeline_mode<synchronous>, transform_indices = @transform_5, window_bounds = array<i64: 1, 5>}, {pipeline_mode = #tpu.pipeline_mode<synchronous>, transform_indices = @transform_6, window_bounds = array<i64: 1, 1>}, {transform_indices = @transform_7, window_bounds = array<i64: 1, 128>}]} {
    %c0 = arith.constant 0 : index
    %c0_0 = arith.constant 0 : index
    %0 = vector.load %arg1[%c0, %c0_0] : memref<2x128xf32, #tpu.memory_space<vmem>>, vector<1x128xf32>
    %c1 = arith.constant 1 : index
    %c0_1 = arith.constant 0 : index
    %1 = vector.load %arg1[%c1, %c0_1] : memref<2x128xf32, #tpu.memory_space<vmem>>, vector<1x128xf32>
    %c0_2 = arith.constant 0 : index
    %c0_3 = arith.constant 0 : index
    %2 = vector.load %arg2[%c0_2, %c0_3] : memref<10x2xf32, #tpu.memory_space<vmem>>, vector<10x2xf32>
    %3 = vector.extract_strided_slice %2 {offsets = [0, 0], sizes = [10, 1], strides = [1, 1]} : vector<10x2xf32> to vector<10x1xf32>
    %4 = vector.broadcast %3 : vector<10x1xf32> to vector<10x128xf32>
    %5 = vector.broadcast %0 : vector<1x128xf32> to vector<10x128xf32>
    %6 = arith.mulf %4, %5 : vector<10x128xf32>
    %7 = vector.extract_strided_slice %2 {offsets = [0, 1], sizes = [10, 1], strides = [1, 1]} : vector<10x2xf32> to vector<10x1xf32>
    %8 = vector.broadcast %7 : vector<10x1xf32> to vector<10x128xf32>
    %9 = vector.broadcast %1 : vector<1x128xf32> to vector<10x128xf32>
    %10 = arith.mulf %8, %9 : vector<10x128xf32>
    %11 = arith.addf %6, %10 : vector<10x128xf32>
    %c0_4 = arith.constant 0 : index
    %c0_5 = arith.constant 0 : index
    %12 = vector.load %arg3[%c0_4, %c0_5] : memref<10x1xf32, #tpu.memory_space<vmem>>, vector<10x1xf32>
    %13 = vector.broadcast %12 : vector<10x1xf32> to vector<10x128xf32>
    %14 = arith.addf %11, %13 : vector<10x128xf32>
    %cst = arith.constant 0.000000e+00 : f32
    %15 = vector.broadcast %cst : f32 to vector<10x128xf32>
    %16 = arith.maximumf %14, %15 : vector<10x128xf32>
    %c0_6 = arith.constant 0 : index
    %c0_7 = arith.constant 0 : index
    %17 = vector.load %arg4[%c0_6, %c0_7] : memref<5x10xf32, #tpu.memory_space<vmem>>, vector<5x10xf32>
    %c0_8 = arith.constant 0 : index
    %c0_9 = arith.constant 0 : index
    %18 = vector.load %arg5[%c0_8, %c0_9] : memref<5x1xf32, #tpu.memory_space<vmem>>, vector<5x1xf32>
    %19 = vector.shape_cast %18 : vector<5x1xf32> to vector<5x1xf32>
    %20 = vector.broadcast %19 : vector<5x1xf32> to vector<5x128xf32>
    %21 = vector.extract_strided_slice %17 {offsets = [0, 0], sizes = [5, 1], strides = [1, 1]} : vector<5x10xf32> to vector<5x1xf32>
    %22 = vector.extract_strided_slice %16 {offsets = [0, 0], sizes = [1, 128], strides = [1, 1]} : vector<10x128xf32> to vector<1x128xf32>
    %23 = vector.broadcast %21 : vector<5x1xf32> to vector<5x128xf32>
    %24 = vector.broadcast %22 : vector<1x128xf32> to vector<5x128xf32>
    %25 = arith.mulf %23, %24 : vector<5x128xf32>
    %26 = arith.addf %20, %25 : vector<5x128xf32>
    %27 = vector.extract_strided_slice %17 {offsets = [0, 1], sizes = [5, 1], strides = [1, 1]} : vector<5x10xf32> to vector<5x1xf32>
    %28 = vector.extract_strided_slice %16 {offsets = [1, 0], sizes = [1, 128], strides = [1, 1]} : vector<10x128xf32> to vector<1x128xf32>
    %29 = vector.broadcast %27 : vector<5x1xf32> to vector<5x128xf32>
    %30 = vector.broadcast %28 : vector<1x128xf32> to vector<5x128xf32>
    %31 = arith.mulf %29, %30 : vector<5x128xf32>
    %32 = arith.addf %26, %31 : vector<5x128xf32>
    %33 = vector.extract_strided_slice %17 {offsets = [0, 2], sizes = [5, 1], strides = [1, 1]} : vector<5x10xf32> to vector<5x1xf32>
    %34 = vector.extract_strided_slice %16 {offsets = [2, 0], sizes = [1, 128], strides = [1, 1]} : vector<10x128xf32> to vector<1x128xf32>
    %35 = vector.broadcast %33 : vector<5x1xf32> to vector<5x128xf32>
    %36 = vector.broadcast %34 : vector<1x128xf32> to vector<5x128xf32>
    %37 = arith.mulf %35, %36 : vector<5x128xf32>
    %38 = arith.addf %32, %37 : vector<5x128xf32>
    %39 = vector.extract_strided_slice %17 {offsets = [0, 3], sizes = [5, 1], strides = [1, 1]} : vector<5x10xf32> to vector<5x1xf32>
    %40 = vector.extract_strided_slice %16 {offsets = [3, 0], sizes = [1, 128], strides = [1, 1]} : vector<10x128xf32> to vector<1x128xf32>
    %41 = vector.broadcast %39 : vector<5x1xf32> to vector<5x128xf32>
    %42 = vector.broadcast %40 : vector<1x128xf32> to vector<5x128xf32>
    %43 = arith.mulf %41, %42 : vector<5x128xf32>
    %44 = arith.addf %38, %43 : vector<5x128xf32>
    %45 = vector.extract_strided_slice %17 {offsets = [0, 4], sizes = [5, 1], strides = [1, 1]} : vector<5x10xf32> to vector<5x1xf32>
    %46 = vector.extract_strided_slice %16 {offsets = [4, 0], sizes = [1, 128], strides = [1, 1]} : vector<10x128xf32> to vector<1x128xf32>
    %47 = vector.broadcast %45 : vector<5x1xf32> to vector<5x128xf32>
    %48 = vector.broadcast %46 : vector<1x128xf32> to vector<5x128xf32>
    %49 = arith.mulf %47, %48 : vector<5x128xf32>
    %50 = arith.addf %44, %49 : vector<5x128xf32>
    %51 = vector.extract_strided_slice %17 {offsets = [0, 5], sizes = [5, 1], strides = [1, 1]} : vector<5x10xf32> to vector<5x1xf32>
    %52 = vector.extract_strided_slice %16 {offsets = [5, 0], sizes = [1, 128], strides = [1, 1]} : vector<10x128xf32> to vector<1x128xf32>
    %53 = vector.broadcast %51 : vector<5x1xf32> to vector<5x128xf32>
    %54 = vector.broadcast %52 : vector<1x128xf32> to vector<5x128xf32>
    %55 = arith.mulf %53, %54 : vector<5x128xf32>
    %56 = arith.addf %50, %55 : vector<5x128xf32>
    %57 = vector.extract_strided_slice %17 {offsets = [0, 6], sizes = [5, 1], strides = [1, 1]} : vector<5x10xf32> to vector<5x1xf32>
    %58 = vector.extract_strided_slice %16 {offsets = [6, 0], sizes = [1, 128], strides = [1, 1]} : vector<10x128xf32> to vector<1x128xf32>
    %59 = vector.broadcast %57 : vector<5x1xf32> to vector<5x128xf32>
    %60 = vector.broadcast %58 : vector<1x128xf32> to vector<5x128xf32>
    %61 = arith.mulf %59, %60 : vector<5x128xf32>
    %62 = arith.addf %56, %61 : vector<5x128xf32>
    %63 = vector.extract_strided_slice %17 {offsets = [0, 7], sizes = [5, 1], strides = [1, 1]} : vector<5x10xf32> to vector<5x1xf32>
    %64 = vector.extract_strided_slice %16 {offsets = [7, 0], sizes = [1, 128], strides = [1, 1]} : vector<10x128xf32> to vector<1x128xf32>
    %65 = vector.broadcast %63 : vector<5x1xf32> to vector<5x128xf32>
    %66 = vector.broadcast %64 : vector<1x128xf32> to vector<5x128xf32>
    %67 = arith.mulf %65, %66 : vector<5x128xf32>
    %68 = arith.addf %62, %67 : vector<5x128xf32>
    %69 = vector.extract_strided_slice %17 {offsets = [0, 8], sizes = [5, 1], strides = [1, 1]} : vector<5x10xf32> to vector<5x1xf32>
    %70 = vector.extract_strided_slice %16 {offsets = [8, 0], sizes = [1, 128], strides = [1, 1]} : vector<10x128xf32> to vector<1x128xf32>
    %71 = vector.broadcast %69 : vector<5x1xf32> to vector<5x128xf32>
    %72 = vector.broadcast %70 : vector<1x128xf32> to vector<5x128xf32>
    %73 = arith.mulf %71, %72 : vector<5x128xf32>
    %74 = arith.addf %68, %73 : vector<5x128xf32>
    %75 = vector.extract_strided_slice %17 {offsets = [0, 9], sizes = [5, 1], strides = [1, 1]} : vector<5x10xf32> to vector<5x1xf32>
    %76 = vector.extract_strided_slice %16 {offsets = [9, 0], sizes = [1, 128], strides = [1, 1]} : vector<10x128xf32> to vector<1x128xf32>
    %77 = vector.broadcast %75 : vector<5x1xf32> to vector<5x128xf32>
    %78 = vector.broadcast %76 : vector<1x128xf32> to vector<5x128xf32>
    %79 = arith.mulf %77, %78 : vector<5x128xf32>
    %80 = arith.addf %74, %79 : vector<5x128xf32>
    %cst_10 = arith.constant 0.000000e+00 : f32
    %81 = vector.broadcast %cst_10 : f32 to vector<5x128xf32>
    %82 = arith.maximumf %80, %81 : vector<5x128xf32>
    %c0_11 = arith.constant 0 : index
    %c0_12 = arith.constant 0 : index
    %83 = vector.load %arg6[%c0_11, %c0_12] : memref<1x5xf32, #tpu.memory_space<vmem>>, vector<1x5xf32>
    %c0_13 = arith.constant 0 : index
    %c0_14 = arith.constant 0 : index
    %84 = vector.load %arg7[%c0_13, %c0_14] : memref<1x1xf32, #tpu.memory_space<vmem>>, vector<1x1xf32>
    %85 = vector.shape_cast %84 : vector<1x1xf32> to vector<1x1xf32>
    %86 = vector.broadcast %85 : vector<1x1xf32> to vector<1x128xf32>
    %87 = vector.extract_strided_slice %83 {offsets = [0, 0], sizes = [1, 1], strides = [1, 1]} : vector<1x5xf32> to vector<1x1xf32>
    %88 = vector.extract_strided_slice %82 {offsets = [0, 0], sizes = [1, 128], strides = [1, 1]} : vector<5x128xf32> to vector<1x128xf32>
    %89 = vector.broadcast %87 : vector<1x1xf32> to vector<1x128xf32>
    %90 = arith.mulf %89, %88 : vector<1x128xf32>
    %91 = arith.addf %86, %90 : vector<1x128xf32>
    %92 = vector.extract_strided_slice %83 {offsets = [0, 1], sizes = [1, 1], strides = [1, 1]} : vector<1x5xf32> to vector<1x1xf32>
    %93 = vector.extract_strided_slice %82 {offsets = [1, 0], sizes = [1, 128], strides = [1, 1]} : vector<5x128xf32> to vector<1x128xf32>
    %94 = vector.broadcast %92 : vector<1x1xf32> to vector<1x128xf32>
    %95 = arith.mulf %94, %93 : vector<1x128xf32>
    %96 = arith.addf %91, %95 : vector<1x128xf32>
    %97 = vector.extract_strided_slice %83 {offsets = [0, 2], sizes = [1, 1], strides = [1, 1]} : vector<1x5xf32> to vector<1x1xf32>
    %98 = vector.extract_strided_slice %82 {offsets = [2, 0], sizes = [1, 128], strides = [1, 1]} : vector<5x128xf32> to vector<1x128xf32>
    %99 = vector.broadcast %97 : vector<1x1xf32> to vector<1x128xf32>
    %100 = arith.mulf %99, %98 : vector<1x128xf32>
    %101 = arith.addf %96, %100 : vector<1x128xf32>
    %102 = vector.extract_strided_slice %83 {offsets = [0, 3], sizes = [1, 1], strides = [1, 1]} : vector<1x5xf32> to vector<1x1xf32>
    %103 = vector.extract_strided_slice %82 {offsets = [3, 0], sizes = [1, 128], strides = [1, 1]} : vector<5x128xf32> to vector<1x128xf32>
    %104 = vector.broadcast %102 : vector<1x1xf32> to vector<1x128xf32>
    %105 = arith.mulf %104, %103 : vector<1x128xf32>
    %106 = arith.addf %101, %105 : vector<1x128xf32>
    %107 = vector.extract_strided_slice %83 {offsets = [0, 4], sizes = [1, 1], strides = [1, 1]} : vector<1x5xf32> to vector<1x1xf32>
    %108 = vector.extract_strided_slice %82 {offsets = [4, 0], sizes = [1, 128], strides = [1, 1]} : vector<5x128xf32> to vector<1x128xf32>
    %109 = vector.broadcast %107 : vector<1x1xf32> to vector<1x128xf32>
    %110 = arith.mulf %109, %108 : vector<1x128xf32>
    %111 = arith.addf %106, %110 : vector<1x128xf32>
    %c0_15 = arith.constant 0 : index
    %c0_16 = arith.constant 0 : index
    %112 = vector.load %arg8[%c0_15, %c0_16] : memref<1x128xf32, #tpu.memory_space<vmem>>, vector<1x128xf32>
    tpu.vector_store %arg8[%c0_15, %c0_16], %111 {strides = array<i32>} : memref<1x128xf32, #tpu.memory_space<vmem>>, vector<1x128xf32>,
    return
  }
  func.func @transform_0(%arg0: i32) -> (i32, i32) {
    %c0_i32 = arith.constant 0 : i32
    %c0_i32_0 = arith.constant 0 : i32
    return %c0_i32, %arg0 : i32, i32
  }
  func.func @transform_1(%arg0: i32) -> (i32, i32) {
    %c0_i32 = arith.constant 0 : i32
    %c0_i32_0 = arith.constant 0 : i32
    %c0_i32_1 = arith.constant 0 : i32
    return %c0_i32, %c0_i32_0 : i32, i32
  }
  func.func @transform_2(%arg0: i32) -> (i32, i32) {
    %c0_i32 = arith.constant 0 : i32
    %c0_i32_0 = arith.constant 0 : i32
    %c0_i32_1 = arith.constant 0 : i32
    return %c0_i32, %c0_i32_0 : i32, i32
  }
  func.func @transform_3(%arg0: i32) -> (i32, i32) {
    %c0_i32 = arith.constant 0 : i32
    %c0_i32_0 = arith.constant 0 : i32
    %c0_i32_1 = arith.constant 0 : i32
    return %c0_i32, %c0_i32_0 : i32, i32
  }
  func.func @transform_4(%arg0: i32) -> (i32, i32) {
    %c0_i32 = arith.constant 0 : i32
    %c0_i32_0 = arith.constant 0 : i32
    %c0_i32_1 = arith.constant 0 : i32
    return %c0_i32, %c0_i32_0 : i32, i32
  }
  func.func @transform_5(%arg0: i32) -> (i32, i32) {
    %c0_i32 = arith.constant 0 : i32
    %c0_i32_0 = arith.constant 0 : i32
    %c0_i32_1 = arith.constant 0 : i32
    return %c0_i32, %c0_i32_0 : i32, i32
  }
  func.func @transform_6(%arg0: i32) -> (i32, i32) {
    %c0_i32 = arith.constant 0 : i32
    %c0_i32_0 = arith.constant 0 : i32
    %c0_i32_1 = arith.constant 0 : i32
    return %c0_i32, %c0_i32_0 : i32, i32
  }
  func.func @transform_7(%arg0: i32) -> (i32, i32) {
    %c0_i32 = arith.constant 0 : i32
    %c0_i32_0 = arith.constant 0 : i32
    return %c0_i32, %arg0 : i32, i32
  }
}

</mosaic_0001>

<llo_original>
// kernel: _ffn_pallas.1
$region0: #{_ffn_pallas.1}
  #allocation0 [shape = 'u32[]', space=smem, size = 0x4, offset = 0x4, fixed_abs, tag = 'smem constant byte address 0x4 - core index']
  #allocation1 [shape = 'u32[144,128]{1,0:T(1,128)}', space=vmem, size = 0x12000, scoped, tag = 'internal scratch']
  #allocation2 [shape = 'f32[1,1]{1,0:T(1,128)S(1)}', space=vmem, size = 0x200, scoped, tag = 'scoped memory for _ffn_pallas.1']
  %s0 = inlined_call_operand.vmem [shape: f32[2,128], index: 0, kind: input, shape index: {}]
  %s1 = inlined_call_operand.vmem [shape: f32[10,2], index: 1, kind: input, shape index: {}]
  %s2 = inlined_call_operand.vmem [shape: f32[10,1], index: 2, kind: input, shape index: {}]
  %s3 = inlined_call_operand.vmem [shape: f32[5,10], index: 3, kind: input, shape index: {}]
  %s4 = inlined_call_operand.vmem [shape: f32[5,1], index: 4, kind: input, shape index: {}]
  %s5 = inlined_call_operand.vmem [shape: f32[1,5], index: 5, kind: input, shape index: {}]
  %s6 = inlined_call_operand.<no memory space> [shape: f32[1,1], index: 6, kind: input, shape index: {}]
  %s7 = inlined_call_operand.hbm [shape: f32[1,128], index: 7, kind: output, shape index: {}]
  %s8 = sld [smem:[#allocation0]]
  $region38: #{_ffn_pallas.1} parent=0
    _
  %s10 = ssub.s32 1, %s8
  %s11 = scalar_select 0, %s10, %s8
  %v12 = vstv %s6
  %13 = vst [vmem:[#allocation2] sm:$0x1] %v12
  $region1: #{_ffn_pallas.1} parent=0
    #allocation3 [shape = 'u8[512]{0}', space=vmem, size = 0x400, scoped, tag = 'output window, operand 0, single buffered']
    #allocation4 [shape = 's32[1]{0}', space=sflag, size = 0x4, scoped, tag = 'scoped memory for _ffn_pallas.1']
    %14 = vsyncpa [#allocation4], 0
    // Predicated region
    $region2: #{_ffn_pallas.1} parent=1 // pred_check
      _
    $region3: #{_ffn_pallas.1} parent=1 // pred_check_branch
      %16 = sbr.rel (0) target = $region5
    $region4: #{_ffn_pallas.1} parent=1 // pred_region
      _
    $region5: #{_ffn_pallas.1} parent=1 // pred_fallthru
      _
    // Predicated region
    $region6: #{_ffn_pallas.1} parent=1 // pred_check
      _
    $region7: #{_ffn_pallas.1} parent=1 // pred_check_branch
      %18 = sbr.rel (0) target = $region9
    $region8: #{_ffn_pallas.1} parent=1 // pred_region
      _
    $region9: #{_ffn_pallas.1} parent=1 // pred_fallthru
      _
    // Predicated region
    $region10: #{_ffn_pallas.1} parent=1 // pred_check
      _
    $region11: #{_ffn_pallas.1} parent=1 // pred_check_branch
      %20 = sbr.rel (0) target = $region13
    $region12: #{_ffn_pallas.1} parent=1 // pred_region
      _
    $region13: #{_ffn_pallas.1} parent=1 // pred_fallthru
      _
    // Predicated region
    $region14: #{_ffn_pallas.1} parent=1 // pred_check
      _
    $region15: #{_ffn_pallas.1} parent=1 // pred_check_branch
      %22 = sbr.rel (0) target = $region17
    $region16: #{_ffn_pallas.1} parent=1 // pred_region
      _
    $region17: #{_ffn_pallas.1} parent=1 // pred_fallthru
      _
    // Predicated region
    $region18: #{_ffn_pallas.1} parent=1 // pred_check
      _
    $region19: #{_ffn_pallas.1} parent=1 // pred_check_branch
      %24 = sbr.rel (0) target = $region21
    $region20: #{_ffn_pallas.1} parent=1 // pred_region
      _
    $region21: #{_ffn_pallas.1} parent=1 // pred_fallthru
      _
    // Predicated region
    $region22: #{_ffn_pallas.1} parent=1 // pred_check
      _
    $region23: #{_ffn_pallas.1} parent=1 // pred_check_branch
      %26 = sbr.rel (0) target = $region25
    $region24: #{_ffn_pallas.1} parent=1 // pred_region
      _
    $region25: #{_ffn_pallas.1} parent=1 // pred_fallthru
      _
    // Predicated region
    $region26: #{_ffn_pallas.1} parent=1 // pred_check
      _
    $region27: #{_ffn_pallas.1} parent=1 // pred_check_branch
      %28 = sbr.rel (0) target = $region29
    $region28: #{_ffn_pallas.1} parent=1 // pred_region
      _
    $region29: #{_ffn_pallas.1} parent=1 // pred_fallthru
      _
    %v29 = vld [vmem:[%s0] sm:$0x1]
    %v30 = vld [vmem:[%s0 + $0x1] sm:$0x1]
    %v31 = vld [vmem:[%s1] sm:$0xff]
    %v32 = vld [vmem:[%s1 + $0x8] sm:$0x3]
    %34 = vset.pattern.permute.xlu0 0
    %35 = vperm.xlu0 %34, %v31
    %v36 = vpop.permute.xlu0 %35
    %39 = vset.pattern.permute.xlu0 0
    %40 = vperm.xlu0 %39, %v32
    %v41 = vpop.permute.xlu0 %40
    %v43 = vlaneseq
    %v44 = vshrl.u32 %v43, 7
    %v45 = vsub.s32 0, %v44
    %v46 = vrot.slane %v29, %v45
    %v47 = vmul.f32 %v36, %v46
    %v48 = vmul.f32 %v41, %v46
    %49 = vset.pattern.permute.xlu0 1
    %50 = vperm.xlu0 %49, %v31
    %v51 = vpop.permute.xlu0 %50
    %53 = vset.pattern.permute.xlu0 1
    %54 = vperm.xlu0 %53, %v32
    %v55 = vpop.permute.xlu0 %54
    %v57 = vlaneseq
    %v58 = vshrl.u32 %v57, 7
    %v59 = vsub.s32 0, %v58
    %v60 = vrot.slane %v30, %v59
    %v61 = vmul.f32 %v51, %v60
    %v62 = vmul.f32 %v55, %v60
    %v63 = vadd.f32 %v47, %v61
    %v64 = vadd.f32 %v48, %v62
    %v65 = vld [vmem:[%s2] sm:$0xff]
    %v66 = vld [vmem:[%s2 + $0x8] sm:$0x3]
    %68 = vset.pattern.permute.xlu0 0
    %69 = vperm.xlu0 %68, %v65
    %v70 = vpop.permute.xlu0 %69
    %73 = vset.pattern.permute.xlu0 0
    %74 = vperm.xlu0 %73, %v66
    %v75 = vpop.permute.xlu0 %74
    %v77 = vadd.f32 %v63, %v70
    %v78 = vadd.f32 %v64, %v75
    %v79 = vmax.f32 %v77, 0.0
    %v80 = vmax.f32 %v78, 0.0
    %v81 = vld [vmem:[%s3] sm:$0x1f]
    %v82 = vld [vmem:[%s4] sm:$0x1f]
    %84 = vset.pattern.permute.xlu0 0
    %85 = vperm.xlu0 %84, %v82
    %v86 = vpop.permute.xlu0 %85
    %89 = vset.pattern.permute.xlu0 0
    %90 = vperm.xlu0 %89, %v81
    %v91 = vpop.permute.xlu0 %90
    %v93 = vlaneseq
    %v94 = vshrl.u32 %v93, 7
    %v95 = vsub.s32 0, %v94
    %v96 = vrot.slane %v79, %v95
    %v97 = vmul.f32 %v91, %v96
    %v98 = vadd.f32 %v86, %v97
    %99 = vset.pattern.permute.xlu0 1
    %100 = vperm.xlu0 %99, %v81
    %v101 = vpop.permute.xlu0 %100
    %v103 = vlaneseq
    %v104 = vshrl.u32 %v103, 7
    %v105 = vsub.s32 1, %v104
    %v106 = vrot.slane %v79, %v105
    %v107 = vmul.f32 %v101, %v106
    %v108 = vadd.f32 %v98, %v107
    %109 = vset.pattern.permute.xlu0 2
    %110 = vperm.xlu0 %109, %v81
    %v111 = vpop.permute.xlu0 %110
    %v113 = vlaneseq
    %v114 = vshrl.u32 %v113, 7
    %v115 = vsub.s32 2, %v114
    %v116 = vrot.slane %v79, %v115
    %v117 = vmul.f32 %v111, %v116
    %v118 = vadd.f32 %v108, %v117
    %119 = vset.pattern.permute.xlu0 3
    %120 = vperm.xlu0 %119, %v81
    %v121 = vpop.permute.xlu0 %120
    %v123 = vlaneseq
    %v124 = vshrl.u32 %v123, 7
    %v125 = vsub.s32 3, %v124
    %v126 = vrot.slane %v79, %v125
    %v127 = vmul.f32 %v121, %v126
    %v128 = vadd.f32 %v118, %v127
    %129 = vset.pattern.permute.xlu0 4
    %130 = vperm.xlu0 %129, %v81
    %v131 = vpop.permute.xlu0 %130
    %v133 = vlaneseq
    %v134 = vshrl.u32 %v133, 7
    %v135 = vsub.s32 4, %v134
    %v136 = vrot.slane %v79, %v135
    %v137 = vmul.f32 %v131, %v136
    %v138 = vadd.f32 %v128, %v137
    %139 = vset.pattern.permute.xlu0 5
    %140 = vperm.xlu0 %139, %v81
    %v141 = vpop.permute.xlu0 %140
    %v143 = vlaneseq
    %v144 = vshrl.u32 %v143, 7
    %v145 = vsub.s32 5, %v144
    %v146 = vrot.slane %v79, %v145
    %v147 = vmul.f32 %v141, %v146
    %v148 = vadd.f32 %v138, %v147
    %149 = vset.pattern.permute.xlu0 6
    %150 = vperm.xlu0 %149, %v81
    %v151 = vpop.permute.xlu0 %150
    %v153 = vlaneseq
    %v154 = vshrl.u32 %v153, 7
    %v155 = vsub.s32 6, %v154
    %v156 = vrot.slane %v79, %v155
    %v157 = vmul.f32 %v151, %v156
    %v158 = vadd.f32 %v148, %v157
    %159 = vset.pattern.permute.xlu0 7
    %160 = vperm.xlu0 %159, %v81
    %v161 = vpop.permute.xlu0 %160
    %v163 = vlaneseq
    %v164 = vshrl.u32 %v163, 7
    %v165 = vsub.s32 7, %v164
    %v166 = vrot.slane %v79, %v165
    %v167 = vmul.f32 %v161, %v166
    %v168 = vadd.f32 %v158, %v167
    %169 = vset.pattern.permute.xlu0 8
    %170 = vperm.xlu0 %169, %v81
    %v171 = vpop.permute.xlu0 %170
    %v173 = vlaneseq
    %v174 = vshrl.u32 %v173, 7
    %v175 = vsub.s32 0, %v174
    %v176 = vrot.slane %v80, %v175
    %v177 = vmul.f32 %v171, %v176
    %v178 = vadd.f32 %v168, %v177
    %179 = vset.pattern.permute.xlu0 9
    %180 = vperm.xlu0 %179, %v81
    %v181 = vpop.permute.xlu0 %180
    %v183 = vlaneseq
    %v184 = vshrl.u32 %v183, 7
    %v185 = vsub.s32 1, %v184
    %v186 = vrot.slane %v80, %v185
    %v187 = vmul.f32 %v181, %v186
    %v188 = vadd.f32 %v178, %v187
    %v189 = vmax.f32 %v188, 0.0
    %v190 = vld [vmem:[%s5] sm:$0x1]
    %v191 = vld [vmem:[#allocation2] sm:$0x1]
    %193 = vset.pattern.permute.xlu0 0
    %194 = vperm.xlu0 %193, %v191
    %v195 = vpop.permute.xlu0 %194
    %v197 = vlaneseq
    %v198 = vshrl.u32 %v197, 7
    %v199 = vsub.s32 0, %v198
    %v200 = vrot.slane %v195, %v199
    %202 = vset.pattern.permute.xlu0 0
    %203 = vperm.xlu0 %202, %v190
    %v204 = vpop.permute.xlu0 %203
    %v206 = vlaneseq
    %v207 = vshrl.u32 %v206, 7
    %v208 = vsub.s32 0, %v207
    %v209 = vrot.slane %v204, %v208
    %v210 = vmul.f32 %v209, %v189
    %v211 = vadd.f32 %v200, %v210
    %212 = vset.pattern.permute.xlu0 1
    %213 = vperm.xlu0 %212, %v190
    %v214 = vpop.permute.xlu0 %213
    %v216 = vlaneseq
    %v217 = vshrl.u32 %v216, 7
    %v218 = vsub.s32 0, %v217
    %v219 = vrot.slane %v214, %v218
    %v220 = vmul.f32 %v219, %v189
    %v222 = vrot.slane %v220, 1
    %v224 = vadd.f32 %v211, %v222
    %225 = vset.pattern.permute.xlu0 2
    %226 = vperm.xlu0 %225, %v190
    %v227 = vpop.permute.xlu0 %226
    %v229 = vlaneseq
    %v230 = vshrl.u32 %v229, 7
    %v231 = vsub.s32 0, %v230
    %v232 = vrot.slane %v227, %v231
    %v233 = vmul.f32 %v232, %v189
    %v235 = vrot.slane %v233, 2
    %v237 = vadd.f32 %v224, %v235
    %238 = vset.pattern.permute.xlu0 3
    %239 = vperm.xlu0 %238, %v190
    %v240 = vpop.permute.xlu0 %239
    %v242 = vlaneseq
    %v243 = vshrl.u32 %v242, 7
    %v244 = vsub.s32 0, %v243
    %v245 = vrot.slane %v240, %v244
    %v246 = vmul.f32 %v245, %v189
    %v248 = vrot.slane %v246, 3
    %v250 = vadd.f32 %v237, %v248
    %251 = vset.pattern.permute.xlu0 4
    %252 = vperm.xlu0 %251, %v190
    %v253 = vpop.permute.xlu0 %252
    %v255 = vlaneseq
    %v256 = vshrl.u32 %v255, 7
    %v257 = vsub.s32 0, %v256
    %v258 = vrot.slane %v253, %v257
    %v259 = vmul.f32 %v258, %v189
    %v261 = vrot.slane %v259, 4
    %v263 = vadd.f32 %v250, %v261
    %264 = vst [vmem:[#allocation3] sm:$0x1] %v263
    // Predicated region
    $region30: #{_ffn_pallas.1} parent=1 // pred_check
      _
    $region31: #{_ffn_pallas.1} parent=1 // pred_check_branch
      %266 = sbr.rel (0) target = $region33
    $region32: #{_ffn_pallas.1} parent=1 // pred_region
      %s268 = ssub.s32 16, 16
      %269 = vsyncadd [#allocation4], %s268
      %s271 = sshll.u32 [#allocation3], 4
      %s272 = int_to_ptr.vmem [resolvable:$true] %s271
      %274 = dma.vmem_to_hbm [thread:$0]  %s272, 16, %s7, [#allocation4]
    $region33: #{_ffn_pallas.1} parent=1 // pred_fallthru
      _
    // Predicated region
    $region34: #{_ffn_pallas.1} parent=1 // pred_check
      _
    $region35: #{_ffn_pallas.1} parent=1 // pred_check_branch
      %276 = sbr.rel (0) target = $region37
    $region36: #{_ffn_pallas.1} parent=1 // pred_region
      %277 = dma.done [#allocation4], 16
    $region37: #{_ffn_pallas.1} parent=1 // pred_fallthru
      _
    %278 = vsyncpa [#allocation4], 1

</llo_original>
